<compile_context>
chip_gen: v6e
topology: v6e:2x2x1
jax: 0.10.0
libtpu: 0.0.40
codegen_flags: <defaults>
</compile_context>

<pallas_src>
import jax
import jax.numpy as jnp
from jax import lax
from jax.experimental import pallas as pl
from jax.experimental.pallas import tpu as pltpu


# ----------------------------------------------------------------------------
# VMEM budgeting
# ----------------------------------------------------------------------------
def _vmem_capacity_bytes():
    try:
        return int(pltpu.get_tpu_info().vmem_capacity_bytes)
    except Exception:
        return 64 * 1024 * 1024          # conservative: v7x per-TensorCore VMEM


_VMEM_CAP = _vmem_capacity_bytes()
_VMEM_LIMIT = min(int(_VMEM_CAP * 0.85), 112 * 1024 * 1024)
_VMEM_BUDGET = int(_VMEM_LIMIT * 0.6)    # headroom for double-buffering + temps


# ----------------------------------------------------------------------------
# Surrogate UNet: fused residual 1x1 conv, NCHW kept, spatial on lanes.
# Conditional / unconditional halves are batched into ONE pallas_call.
# ----------------------------------------------------------------------------
def _choose_lane_tile(hw, c, itemsize, budget):
    # in+out tiles double-buffered + f32 temporaries, per lane of spatial tile
    per_lane = max(1, c * (4 * itemsize + 8))
    ts = budget // per_lane
    if ts >= hw:
        return hw                         # full extent: always a legal block
    ts = max(128, (ts // 128) * 128)
    return min(ts, hw, 32768)


def pointwise_residual_multi(x_nchw, w_oc_ic, biases, *, conv_dtype=None):
    """out[h] = conv1x1(x) + biases[h] + x, for every bias row h, in one kernel.

    x_nchw: (B, C, H, W); w: (C, C); biases: (nh, C).  Returns (nh, B, C, H, W).
    """
    nh, C = biases.shape
    B, C2, H, W = x_nchw.shape
    assert C2 == C
    HW = H * W
    x3 = x_nchw.reshape(B, C, HW)                       # free reshape, NCHW kept
    itemsize = jnp.dtype(x3.dtype).itemsize
    ts = _choose_lane_tile(HW, C, itemsize, _VMEM_BUDGET)
    nt = pl.cdiv(HW, ts)                                # partial last tile is fine
    bias3 = biases.reshape(nh, C, 1).astype(jnp.float32)

    if C >= 8:
        # MXU path.  conv_dtype=jnp.bfloat16 recommended for realistic C (2-4x
        # MXU rate); defaults to the input dtype to preserve reference numerics.
        op_dt = conv_dtype if conv_dtype is not None else x3.dtype

        def kernel(x_ref, w_ref, b_ref, o_ref):
            x = x_ref[0]                                              # (C, ts)
            y = jnp.dot(w_ref[...].astype(op_dt), x.astype(op_dt),
                        preferred_element_type=jnp.float32)
            y = y + b_ref[0] + x.astype(jnp.float32)                  # bias + residual
            o_ref[0, 0] = y.astype(o_ref.dtype)

        w_spec = pl.BlockSpec((C, C), lambda h, bi, s: (0, 0))
        w_arg = w_oc_ic.astype(op_dt)
    else:
        # Tiny C: skip the MXU, do C*C VPU scalar-vector multiply-adds with the
        # weight held in SMEM (avoids a sublane-starved (C, ts) matmul).
        def kernel(x_ref, w_ref, b_ref, o_ref):
            x = x_ref[0].astype(jnp.float32)                          # (C, ts)
            rows = []
            for oc in range(C):
                acc = x[oc:oc + 1, :]                                 # residual
                for ic in range(C):
                    acc = acc + w_ref[oc, ic] * x[ic:ic + 1, :]
                rows.append(acc)
            y = jnp.concatenate(rows, axis=0) + b_ref[0]              # + bias
            o_ref[0, 0] = y.astype(o_ref.dtype)

        w_spec = pl.BlockSpec(memory_space=pltpu.MemorySpace.SMEM)
        w_arg = w_oc_ic.astype(jnp.float32)

    out = pl.pallas_call(
        kernel,
        out_shape=jax.ShapeDtypeStruct((nh, B, C, HW), x3.dtype),
        grid_spec=pltpu.PrefetchScalarGridSpec(
            num_scalar_prefetch=0,
            grid=(nh, B, nt),
            in_specs=[
                pl.BlockSpec((1, C, ts), lambda h, bi, s: (bi, 0, s)),   # activations
                w_spec,                                                  # weight (resident)
                pl.BlockSpec((1, C, 1), lambda h, bi, s: (h, 0, 0)),     # per-half bias
            ],
            out_specs=pl.BlockSpec((1, 1, C, ts), lambda h, bi, s: (h, bi, 0, s)),
        ),
        compiler_params=pltpu.CompilerParams(
            dimension_semantics=("parallel", "parallel", "parallel"),
            vmem_limit_bytes=_VMEM_LIMIT,
        ),
    )(x3, w_arg, bias3)
    return out.reshape(nh, B, C, H, W)


def make_surrogate_unet(w, b, cond_embed):
    # TODO(synk): the real wrapped UNet is an arbitrary external nn.Module; this
    # surrogate (residual 1x1 conv + channel conditioning that is dropped at
    # cond_drop_prob=1.0) only provides concrete logits/null_logits for CFG.
    def unet_fn(x, *, cond_drop_prob=0.0):
        bias = (b + (1.0 - cond_drop_prob) * cond_embed)[None, :]      # (1, C)
        return pointwise_residual_multi(x, w, bias)[0]

    def unet_dual_fn(x):
        # Conditional + unconditional passes in ONE pallas_call; returns the
        # packed (2, B, C, H, W) array so CFG reads both halves without copies.
        biases = jnp.stack([b + cond_embed, b], axis=0)                # (2, C)
        return pointwise_residual_multi(x, w, biases)

    return unet_fn, unet_dual_fn


# ----------------------------------------------------------------------------
# Fused CFG combination (the actual CFGUnetWithScale.forward math).
# out = gamma * (alpha * logits + beta * null_logits), per-sample scalars.
# ----------------------------------------------------------------------------
def _rows_lanes(n):
    return (n // 128, 128) if n % 128 == 0 else (1, n)


def _make_cfg_resident_kernel(n_valid, cond_scale, rescaled_phi,
                              remove_parallel, keep_frac):
    cs = float(cond_scale)
    beta = 1.0 - cs
    kpf = float(keep_frac)
    phi = float(rescaled_phi)
    inv_n = 1.0 / float(n_valid)
    inv_nm1 = 1.0 / float(max(n_valid - 1, 1))
    need_proj = bool(remove_parallel)
    need_std = phi != 0.0

    def kernel(l_ref, n_ref, o_ref):
        # inputs: (1, bb, rows, lanes) blocks; output: (bb, rows, lanes).
        l = l_ref[0].astype(jnp.float32)
        nl = n_ref[0].astype(jnp.float32)
        red = lambda v: jnp.sum(v, axis=(1, 2), keepdims=True)        # per-sample

        alpha = cs
        if need_proj or need_std:
            s_ll = red(l * l)
            s_ln = red(l * nl)
        if need_proj:
            # project(update, logits): coef = <u,l>/<l,l>, u = l - nl
            coef = (s_ll - s_ln) / jnp.maximum(s_ll, 1e-24)
            alpha = cs - (cs - 1.0) * (1.0 - kpf) * coef
        if need_std:
            s_l = red(l)
            s_nl = red(nl)
            s_nn = red(nl * nl)
            var_l = jnp.maximum((s_ll - s_l * s_l * inv_n) * inv_nm1, 0.0)
            s_s = alpha * s_l + beta * s_nl
            s_ss = (alpha * alpha * s_ll + 2.0 * alpha * beta * s_ln
                    + beta * beta * s_nn)
            var_s = jnp.maximum((s_ss - s_s * s_s * inv_n) * inv_nm1, 1e-30)
            gamma = phi * (jnp.sqrt(var_l) * lax.rsqrt(var_s)) + (1.0 - phi)
            a = gamma * alpha
            c = gamma * beta
        else:
            a = alpha
            c = beta
        o_ref[...] = (a * l + c * nl).astype(o_ref.dtype)

    return kernel


def _cfg_resident(l4, n4, li, ni, bb, n_valid, cond_scale, rescaled_phi,
                  remove_parallel, keep_frac):
    _, B, rows, lanes = l4.shape
    kernel = _make_cfg_resident_kernel(n_valid, cond_scale, rescaled_phi,
                                       remove_parallel, keep_frac)
    blk = (1, bb, rows, lanes)
    return pl.pallas_call(
        kernel,
        out_shape=jax.ShapeDtypeStruct((B, rows, lanes), l4.dtype),
        grid_spec=pltpu.PrefetchScalarGridSpec(
            num_scalar_prefetch=0,
            grid=(B // bb,),
            in_specs=[pl.BlockSpec(blk, lambda i: (li, i, 0, 0)),
                      pl.BlockSpec(blk, lambda i: (ni, i, 0, 0))],
            out_specs=pl.BlockSpec((bb, rows, lanes), lambda i: (i, 0, 0)),
        ),
        compiler_params=pltpu.CompilerParams(
            dimension_semantics=("parallel",),
            vmem_limit_bytes=_VMEM_LIMIT,
        ),
    )(l4, n4)


def _cfg_moments_pass(l4, n4, li, ni, rt, nt, rows, need_std):
    _, B, _, lanes = l4.shape
    needs_mask = (rows % rt) != 0

    def kernel(l_ref, n_ref, m_ref):
        t = pl.program_id(1)

        @pl.when(t == 0)
        def _():
            m_ref[...] = jnp.zeros_like(m_ref)

        l = l_ref[0, 0].astype(jnp.float32)                           # (rt, lanes)
        nl = n_ref[0, 0].astype(jnp.float32)
        if needs_mask:
            row = lax.broadcasted_iota(jnp.int32, l.shape, 0) + t * rt
            valid = row < rows
            l = jnp.where(valid, l, 0.0)
            nl = jnp.where(valid, nl, 0.0)
        s0 = jnp.sum(l * l, axis=0, keepdims=True)
        s1 = jnp.sum(l * nl, axis=0, keepdims=True)
        if need_std:
            s2 = jnp.sum(l, axis=0, keepdims=True)
            s3 = jnp.sum(nl, axis=0, keepdims=True)
            s4 = jnp.sum(nl * nl, axis=0, keepdims=True)
        else:
            s2 = s3 = s4 = jnp.zeros_like(s0)
        pad = jnp.zeros((3, s0.shape[1]), jnp.float32)
        m_ref[0] += jnp.concatenate([s0, s1, s2, s3, s4, pad], axis=0)

    return pl.pallas_call(
        kernel,
        out_shape=jax.ShapeDtypeStruct((B, 8, lanes), jnp.float32),
        grid_spec=pltpu.PrefetchScalarGridSpec(
            num_scalar_prefetch=0,
            grid=(B, nt),
            in_specs=[pl.BlockSpec((1, 1, rt, lanes), lambda b, t: (li, b, t, 0)),
                      pl.BlockSpec((1, 1, rt, lanes), lambda b, t: (ni, b, t, 0))],
            out_specs=pl.BlockSpec((1, 8, lanes), lambda b, t: (b, 0, 0)),
        ),
        compiler_params=pltpu.CompilerParams(
            dimension_semantics=("parallel", "arbitrary"),
            vmem_limit_bytes=_VMEM_LIMIT,
        ),
    )(l4, n4)


def _cfg_affine_pass(ab, l4, n4, li, ni, rt, nt):
    _, B, rows, lanes = l4.shape

    def kernel(ab_ref, l_ref, n_ref, o_ref):
        b = pl.program_id(0)
        a = ab_ref[b, 0]
        c = ab_ref[b, 1]
        o_ref[0] = (a * l_ref[0, 0].astype(jnp.float32)
                    + c * n_ref[0, 0].astype(jnp.float32)).astype(o_ref.dtype)

    return pl.pallas_call(
        kernel,
        out_shape=jax.ShapeDtypeStruct((B, rows, lanes), l4.dtype),
        grid_spec=pltpu.PrefetchScalarGridSpec(
            num_scalar_prefetch=0,
            grid=(B, nt),
            in_specs=[
                pl.BlockSpec(memory_space=pltpu.MemorySpace.SMEM),    # (B, 2) scalars
                pl.BlockSpec((1, 1, rt, lanes), lambda b, t: (li, b, t, 0)),
                pl.BlockSpec((1, 1, rt, lanes), lambda b, t: (ni, b, t, 0)),
            ],
            out_specs=pl.BlockSpec((1, rt, lanes), lambda b, t: (b, t, 0)),
        ),
        compiler_params=pltpu.CompilerParams(
            dimension_semantics=("parallel", "parallel"),
            vmem_limit_bytes=_VMEM_LIMIT,
        ),
    )(ab, l4, n4)


def _cfg_tiled(l4, n4, li, ni, n_valid, cond_scale, rescaled_phi,
               remove_parallel, keep_frac, budget):
    """Row-tiled two-pass CFG (moments pass + per-sample affine pass)."""
    _, B, rows, lanes = l4.shape                     # lanes == 128 guaranteed here
    itemsize = jnp.dtype(l4.dtype).itemsize
    per_row = lanes * (6 * itemsize + 12)
    rt = max(8, min(rows, (budget // per_row) // 8 * 8))
    if rt >= rows:
        rt = rows
    nt = pl.cdiv(rows, rt)

    cs = float(cond_scale)
    beta = 1.0 - cs
    kpf = float(keep_frac)
    phi = float(rescaled_phi)
    need_proj = bool(remove_parallel)
    need_std = phi != 0.0

    if need_proj or need_std:
        moments = _cfg_moments_pass(l4, n4, li, ni, rt, nt, rows, need_std)
        m = jnp.sum(moments, axis=-1)                # (B, 8) tiny, plain JAX
        s_ll, s_ln, s_l, s_nl, s_nn = m[:, 0], m[:, 1], m[:, 2], m[:, 3], m[:, 4]
        if need_proj:
            coef = (s_ll - s_ln) / jnp.maximum(s_ll, 1e-24)
            alpha = cs - (cs - 1.0) * (1.0 - kpf) * coef
        else:
            alpha = jnp.full((B,), cs, jnp.float32)
        if need_std:
            inv_n = 1.0 / float(n_valid)
            inv_nm1 = 1.0 / float(max(n_valid - 1, 1))
            var_l = jnp.maximum((s_ll - s_l * s_l * inv_n) * inv_nm1, 0.0)
            s_s = alpha * s_l + beta * s_nl
            s_ss = alpha * alpha * s_ll + 2.0 * alpha * beta * s_ln + beta * beta * s_nn
            var_s = jnp.maximum((s_ss - s_s * s_s * inv_n) * inv_nm1, 1e-30)
            gamma = phi * jnp.sqrt(var_l) * lax.rsqrt(var_s) + (1.0 - phi)
        else:
            gamma = jnp.ones((B,), jnp.float32)
        a = (gamma * alpha).astype(jnp.float32)
        c = (gamma * beta).astype(jnp.float32)
    else:
        a = jnp.full((B,), cs, jnp.float32)
        c = jnp.full((B,), beta, jnp.float32)

    ab = jnp.stack([a, c], axis=-1)                  # (B, 2) -> SMEM
    return _cfg_affine_pass(ab, l4, n4, li, ni, rt, nt)


def _cfg_combine_impl(l4, n4, li, ni, n_valid, cond_scale, rescaled_phi,
                      remove_parallel, keep_frac, budget):
    _, B, rows, lanes = l4.shape
    itemsize = jnp.dtype(l4.dtype).itemsize
    # working set per resident sample: 2 inputs + 1 output double-buffered + f32 temps
    per_sample = rows * lanes * (6 * itemsize + 12)

    if B * per_sample <= budget:                     # whole batch resident, one step
        return _cfg_resident(l4, n4, li, ni, B, n_valid, cond_scale, rescaled_phi,
                             remove_parallel, keep_frac)
    if per_sample <= budget or lanes != 128 or rows < 16:
        # TODO(synk): huge samples whose element count is not a multiple of 128
        # still go whole-sample resident (would need a masked row-tiled variant).
        return _cfg_resident(l4, n4, li, ni, 1, n_valid, cond_scale, rescaled_phi,
                             remove_parallel, keep_frac)
    return _cfg_tiled(l4, n4, li, ni, n_valid, cond_scale, rescaled_phi,
                      remove_parallel, keep_frac, budget)


def cfg_combine(logits, null_logits, *, cond_scale=1.0, rescaled_phi=0.0,
                remove_parallel_component=True, keep_parallel_frac=0.0,
                vmem_budget=None):
    """CFG combine for two separate (B, ...) arrays."""
    if cond_scale == 1:                               # static Python check
        return logits
    B = logits.shape[0]
    N = int(logits.size // B)
    rows, lanes = _rows_lanes(N)
    l4 = logits.reshape(1, B, rows, lanes)            # free reshapes, no padding
    n4 = null_logits.reshape(1, B, rows, lanes)
    budget = _VMEM_BUDGET if vmem_budget is None else int(vmem_budget)
    out3 = _cfg_combine_impl(l4, n4, 0, 0, N, cond_scale, rescaled_phi,
                             remove_parallel_component, keep_parallel_frac, budget)
    return out3.reshape(logits.shape)


def cfg_combine_pair(pair, *, cond_scale=1.0, rescaled_phi=0.0,
                     remove_parallel_component=True, keep_parallel_frac=0.0,
                     vmem_budget=None):
    """CFG combine for a packed (2, B, ...) [logits, null_logits] array (no copies)."""
    if cond_scale == 1:                               # static Python check
        return pair[0]
    out_shape = pair.shape[1:]
    B = out_shape[0]
    N = int(pair[0].size // B)
    rows, lanes = _rows_lanes(N)
    p4 = pair.reshape(2, B, rows, lanes)              # free reshape
    budget = _VMEM_BUDGET if vmem_budget is None else int(vmem_budget)
    out3 = _cfg_combine_impl(p4, p4, 0, 1, N, cond_scale, rescaled_phi,
                             remove_parallel_component, keep_parallel_frac, budget)
    return out3.reshape(out_shape)


class CFGUnetWithScalePallas:
    """JAX/Pallas port of CFGUnetWithScale.forward."""

    def __init__(self, unet_fn, unet_dual_fn=None):
        self.unet_fn = unet_fn
        self.unet_dual_fn = unet_dual_fn              # optional fused cond+uncond call

    def __call__(self, *args, cond_scale=1.0, rescaled_phi=0.0,
                 remove_parallel_component=True, keep_parallel_frac=0.0, **kwargs):
        if cond_scale == 1:                           # static Python check (as in torch)
            return self.unet_fn(*args, cond_drop_prob=0.0, **kwargs)
        if self.unet_dual_fn is not None:
            pair = self.unet_dual_fn(*args, **kwargs)               # (2, B, ...)
            return cfg_combine_pair(
                pair, cond_scale=cond_scale, rescaled_phi=rescaled_phi,
                remove_parallel_component=remove_parallel_component,
                keep_parallel_frac=keep_parallel_frac)
        logits = self.unet_fn(*args, cond_drop_prob=0.0, **kwargs)
        null_logits = self.unet_fn(*args, cond_drop_prob=1.0, **kwargs)
        return cfg_combine(
            logits, null_logits, cond_scale=cond_scale, rescaled_phi=rescaled_phi,
            remove_parallel_component=remove_parallel_component,
            keep_parallel_frac=keep_parallel_frac)


# ----------------------------------------------------------------------------
# Demo / correctness checks
# ----------------------------------------------------------------------------
if __name__ == "__main__":
    key = jax.random.PRNGKey(0)
    kx, kw, kb, kc, k1, k2, k3, k4 = jax.random.split(key, 8)

    B, C, H, W = 2, 4, 16, 16
    x = jax.random.normal(kx, (B, C, H, W), dtype=jnp.float32)
    w = jax.random.normal(kw, (C, C), dtype=jnp.float32) / jnp.sqrt(C)
    b = 0.1 * jax.random.normal(kb, (C,), dtype=jnp.float32)
    cond = 0.5 * jax.random.normal(kc, (C,), dtype=jnp.float32)

    unet_fn, unet_dual_fn = make_surrogate_unet(w, b, cond)
    model = CFGUnetWithScalePallas(unet_fn, unet_dual_fn)

    cond_scale, rescaled_phi, keep_frac = 3.0, 0.7, 0.25
    out = model(x, cond_scale=cond_scale, rescaled_phi=rescaled_phi,
                remove_parallel_component=True, keep_parallel_frac=keep_frac)
    out = jax.block_until_ready(out)
    assert out.shape == x.shape and out.dtype == x.dtype

    # -- reference UNet (pure JAX 1x1 conv) --
    def unet_ref(xx, p):
        be = b + (1.0 - p) * cond
        return jnp.einsum("oc,bchw->bohw", w, xx) + be[None, :, None, None] + xx

    logits_ref = unet_ref(x, 0.0)
    null_ref = unet_ref(x, 1.0)
    pair = unet_dual_fn(x)
    assert jnp.allclose(pair[0], logits_ref, atol=2e-4, rtol=2e-4), "dual conv mismatch"
    assert jnp.allclose(pair[1], null_ref, atol=2e-4, rtol=2e-4), "dual conv mismatch"
    assert jnp.allclose(unet_fn(x, cond_drop_prob=0.0), logits_ref,
                        atol=2e-4, rtol=2e-4), "single conv mismatch"

    # -- reference CFG math (mirrors the PyTorch module) --
    def cfg_ref(l4, n4, cs, phi_, rm, kpf_):
        bsz = l4.shape[0]
        lf = l4.reshape(bsz, -1).astype(jnp.float32)
        nf = n4.reshape(bsz, -1).astype(jnp.float32)
        u = lf - nf
        if rm:
            norm = jnp.maximum(jnp.linalg.norm(lf, axis=-1, keepdims=True), 1e-12)
            unit = lf / norm
            par = jnp.sum(u * unit, axis=-1, keepdims=True) * unit
            u = (u - par) + par * kpf_
        scaled = lf + (cs - 1.0) * u
        if phi_ != 0.0:
            std_l = jnp.std(lf, axis=-1, keepdims=True, ddof=1)
            std_s = jnp.std(scaled, axis=-1, keepdims=True, ddof=1)
            scaled = (scaled * (std_l / std_s)) * phi_ + scaled * (1.0 - phi_)
        return scaled.reshape(l4.shape)

    ref = cfg_ref(logits_ref, null_ref, cond_scale, rescaled_phi, True, keep_frac)
    assert jnp.allclose(out, ref, atol=3e-4, rtol=3e-4), "CFG (pair, resident) mismatch"

    # -- fallback path (two separate UNet calls, separate-array cfg_combine) --
    out2 = CFGUnetWithScalePallas(unet_fn)(
        x, cond_scale=cond_scale, rescaled_phi=rescaled_phi,
        remove_parallel_component=True, keep_parallel_frac=keep_frac)
    assert jnp.allclose(out2, ref, atol=3e-4, rtol=3e-4), "CFG (separate) mismatch"

    # -- cond_scale == 1 early return --
    out1 = model(x, cond_scale=1.0)
    assert jnp.allclose(out1, logits_ref, atol=2e-4, rtol=2e-4), "cond_scale=1 mismatch"

    # -- row-tiled two-pass path (forced tiny VMEM budget, partial last row tile) --
    lt = jax.random.normal(k1, (2, 4, 20, 32), dtype=jnp.float32)
    nt_ = lt + 0.3 * jax.random.normal(k2, (2, 4, 20, 32), dtype=jnp.float32)
    out_t = cfg_combine(lt, nt_, cond_scale=2.5, rescaled_phi=0.5,
                        remove_parallel_component=True, keep_parallel_frac=0.1,
                        vmem_budget=40 * 1024)
    ref_t = cfg_ref(lt, nt_, 2.5, 0.5, True, 0.1)
    assert jnp.allclose(out_t, ref_t, atol=3e-4, rtol=3e-4), "CFG (tiled) mismatch"

    # -- non-128-divisible flat size: full-extent block, no padding --
    lo = jax.random.normal(k3, (2, 3, 5, 7), dtype=jnp.float32)
    no = lo + 0.3 * jax.random.normal(k4, (2, 3, 5, 7), dtype=jnp.float32)
    out_o = cfg_combine(lo, no, cond_scale=1.5, rescaled_phi=0.3)
    ref_o = cfg_ref(lo, no, 1.5, 0.3, True, 0.0)
    assert jnp.allclose(out_o, ref_o, atol=3e-4, rtol=3e-4), "CFG (odd shape) mismatch"

    print("KERNEL_OK")
</pallas_src>

<mosaic_0001>
module attributes {stable_mosaic.version = 11 : i64} {
  func.func @kernel(%arg0: i32, %arg1: i32, %arg2: i32, %arg3: memref<1x4x256xf32, #tpu.memory_space<vmem>>, %arg4: memref<4x4xf32, #tpu.memory_space<smem>>, %arg5: memref<1x4x1xf32, #tpu.memory_space<vmem>>, %arg6: memref<1x1x4x256xf32, #tpu.memory_space<vmem>>) attributes {dimension_semantics = [#tpu.dimension_semantics<parallel>, #tpu.dimension_semantics<parallel>, #tpu.dimension_semantics<parallel>], iteration_bounds = array<i64: 2, 2, 1>, scalar_prefetch = 0 : i64, scratch_operands = 0 : i64, tpu.core_type = #tpu.core_type<tc>, window_params = [{transform_indices = @transform_0, window_bounds = array<i64: 1, 4, 256>}, {transform_indices = @transform_1, window_bounds = array<i64: 4, 4>}, {transform_indices = @transform_2, window_bounds = array<i64: 1, 4, 1>}, {transform_indices = @transform_3, window_bounds = array<i64: 1, 1, 4, 256>}]} {
    %c0 = arith.constant 0 : index
    %c0_0 = arith.constant 0 : index
    %c0_1 = arith.constant 0 : index
    %0 = vector.load %arg3[%c0, %c0_0, %c0_1] : memref<1x4x256xf32, #tpu.memory_space<vmem>>, vector<1x4x256xf32>
    %1 = vector.shape_cast %0 : vector<1x4x256xf32> to vector<4x256xf32>
    %2 = vector.extract_strided_slice %1 {offsets = [0, 0], sizes = [1, 256], strides = [1, 1]} : vector<4x256xf32> to vector<1x256xf32>
    %c0_2 = arith.constant 0 : index
    %c0_3 = arith.constant 0 : index
    %3 = memref.load %arg4[%c0_2, %c0_3] : memref<4x4xf32, #tpu.memory_space<smem>>
    %4 = vector.extract_strided_slice %1 {offsets = [0, 0], sizes = [1, 256], strides = [1, 1]} : vector<4x256xf32> to vector<1x256xf32>
    %5 = vector.broadcast %3 : f32 to vector<1x256xf32>
    %6 = arith.mulf %5, %4 : vector<1x256xf32>
    %7 = arith.addf %2, %6 : vector<1x256xf32>
    %c0_4 = arith.constant 0 : index
    %c1 = arith.constant 1 : index
    %8 = memref.load %arg4[%c0_4, %c1] : memref<4x4xf32, #tpu.memory_space<smem>>
    %9 = vector.extract_strided_slice %1 {offsets = [1, 0], sizes = [1, 256], strides = [1, 1]} : vector<4x256xf32> to vector<1x256xf32>
    %10 = vector.broadcast %8 : f32 to vector<1x256xf32>
    %11 = arith.mulf %10, %9 : vector<1x256xf32>
    %12 = arith.addf %7, %11 : vector<1x256xf32>
    %c0_5 = arith.constant 0 : index
    %c2 = arith.constant 2 : index
    %13 = memref.load %arg4[%c0_5, %c2] : memref<4x4xf32, #tpu.memory_space<smem>>
    %14 = vector.extract_strided_slice %1 {offsets = [2, 0], sizes = [1, 256], strides = [1, 1]} : vector<4x256xf32> to vector<1x256xf32>
    %15 = vector.broadcast %13 : f32 to vector<1x256xf32>
    %16 = arith.mulf %15, %14 : vector<1x256xf32>
    %17 = arith.addf %12, %16 : vector<1x256xf32>
    %c0_6 = arith.constant 0 : index
    %c3 = arith.constant 3 : index
    %18 = memref.load %arg4[%c0_6, %c3] : memref<4x4xf32, #tpu.memory_space<smem>>
    %19 = vector.extract_strided_slice %1 {offsets = [3, 0], sizes = [1, 256], strides = [1, 1]} : vector<4x256xf32> to vector<1x256xf32>
    %20 = vector.broadcast %18 : f32 to vector<1x256xf32>
    %21 = arith.mulf %20, %19 : vector<1x256xf32>
    %22 = arith.addf %17, %21 : vector<1x256xf32>
    %23 = vector.extract_strided_slice %1 {offsets = [1, 0], sizes = [1, 256], strides = [1, 1]} : vector<4x256xf32> to vector<1x256xf32>
    %c1_7 = arith.constant 1 : index
    %c0_8 = arith.constant 0 : index
    %24 = memref.load %arg4[%c1_7, %c0_8] : memref<4x4xf32, #tpu.memory_space<smem>>
    %25 = vector.extract_strided_slice %1 {offsets = [0, 0], sizes = [1, 256], strides = [1, 1]} : vector<4x256xf32> to vector<1x256xf32>
    %26 = vector.broadcast %24 : f32 to vector<1x256xf32>
    %27 = arith.mulf %26, %25 : vector<1x256xf32>
    %28 = arith.addf %23, %27 : vector<1x256xf32>
    %c1_9 = arith.constant 1 : index
    %c1_10 = arith.constant 1 : index
    %29 = memref.load %arg4[%c1_9, %c1_10] : memref<4x4xf32, #tpu.memory_space<smem>>
    %30 = vector.extract_strided_slice %1 {offsets = [1, 0], sizes = [1, 256], strides = [1, 1]} : vector<4x256xf32> to vector<1x256xf32>
    %31 = vector.broadcast %29 : f32 to vector<1x256xf32>
    %32 = arith.mulf %31, %30 : vector<1x256xf32>
    %33 = arith.addf %28, %32 : vector<1x256xf32>
    %c1_11 = arith.constant 1 : index
    %c2_12 = arith.constant 2 : index
    %34 = memref.load %arg4[%c1_11, %c2_12] : memref<4x4xf32, #tpu.memory_space<smem>>
    %35 = vector.extract_strided_slice %1 {offsets = [2, 0], sizes = [1, 256], strides = [1, 1]} : vector<4x256xf32> to vector<1x256xf32>
    %36 = vector.broadcast %34 : f32 to vector<1x256xf32>
    %37 = arith.mulf %36, %35 : vector<1x256xf32>
    %38 = arith.addf %33, %37 : vector<1x256xf32>
    %c1_13 = arith.constant 1 : index
    %c3_14 = arith.constant 3 : index
    %39 = memref.load %arg4[%c1_13, %c3_14] : memref<4x4xf32, #tpu.memory_space<smem>>
    %40 = vector.extract_strided_slice %1 {offsets = [3, 0], sizes = [1, 256], strides = [1, 1]} : vector<4x256xf32> to vector<1x256xf32>
    %41 = vector.broadcast %39 : f32 to vector<1x256xf32>
    %42 = arith.mulf %41, %40 : vector<1x256xf32>
    %43 = arith.addf %38, %42 : vector<1x256xf32>
    %44 = vector.extract_strided_slice %1 {offsets = [2, 0], sizes = [1, 256], strides = [1, 1]} : vector<4x256xf32> to vector<1x256xf32>
    %c2_15 = arith.constant 2 : index
    %c0_16 = arith.constant 0 : index
    %45 = memref.load %arg4[%c2_15, %c0_16] : memref<4x4xf32, #tpu.memory_space<smem>>
    %46 = vector.extract_strided_slice %1 {offsets = [0, 0], sizes = [1, 256], strides = [1, 1]} : vector<4x256xf32> to vector<1x256xf32>
    %47 = vector.broadcast %45 : f32 to vector<1x256xf32>
    %48 = arith.mulf %47, %46 : vector<1x256xf32>
    %49 = arith.addf %44, %48 : vector<1x256xf32>
    %c2_17 = arith.constant 2 : index
    %c1_18 = arith.constant 1 : index
    %50 = memref.load %arg4[%c2_17, %c1_18] : memref<4x4xf32, #tpu.memory_space<smem>>
    %51 = vector.extract_strided_slice %1 {offsets = [1, 0], sizes = [1, 256], strides = [1, 1]} : vector<4x256xf32> to vector<1x256xf32>
    %52 = vector.broadcast %50 : f32 to vector<1x256xf32>
    %53 = arith.mulf %52, %51 : vector<1x256xf32>
    %54 = arith.addf %49, %53 : vector<1x256xf32>
    %c2_19 = arith.constant 2 : index
    %c2_20 = arith.constant 2 : index
    %55 = memref.load %arg4[%c2_19, %c2_20] : memref<4x4xf32, #tpu.memory_space<smem>>
    %56 = vector.extract_strided_slice %1 {offsets = [2, 0], sizes = [1, 256], strides = [1, 1]} : vector<4x256xf32> to vector<1x256xf32>
    %57 = vector.broadcast %55 : f32 to vector<1x256xf32>
    %58 = arith.mulf %57, %56 : vector<1x256xf32>
    %59 = arith.addf %54, %58 : vector<1x256xf32>
    %c2_21 = arith.constant 2 : index
    %c3_22 = arith.constant 3 : index
    %60 = memref.load %arg4[%c2_21, %c3_22] : memref<4x4xf32, #tpu.memory_space<smem>>
    %61 = vector.extract_strided_slice %1 {offsets = [3, 0], sizes = [1, 256], strides = [1, 1]} : vector<4x256xf32> to vector<1x256xf32>
    %62 = vector.broadcast %60 : f32 to vector<1x256xf32>
    %63 = arith.mulf %62, %61 : vector<1x256xf32>
    %64 = arith.addf %59, %63 : vector<1x256xf32>
    %65 = vector.extract_strided_slice %1 {offsets = [3, 0], sizes = [1, 256], strides = [1, 1]} : vector<4x256xf32> to vector<1x256xf32>
    %c3_23 = arith.constant 3 : index
    %c0_24 = arith.constant 0 : index
    %66 = memref.load %arg4[%c3_23, %c0_24] : memref<4x4xf32, #tpu.memory_space<smem>>
    %67 = vector.extract_strided_slice %1 {offsets = [0, 0], sizes = [1, 256], strides = [1, 1]} : vector<4x256xf32> to vector<1x256xf32>
    %68 = vector.broadcast %66 : f32 to vector<1x256xf32>
    %69 = arith.mulf %68, %67 : vector<1x256xf32>
    %70 = arith.addf %65, %69 : vector<1x256xf32>
    %c3_25 = arith.constant 3 : index
    %c1_26 = arith.constant 1 : index
    %71 = memref.load %arg4[%c3_25, %c1_26] : memref<4x4xf32, #tpu.memory_space<smem>>
    %72 = vector.extract_strided_slice %1 {offsets = [1, 0], sizes = [1, 256], strides = [1, 1]} : vector<4x256xf32> to vector<1x256xf32>
    %73 = vector.broadcast %71 : f32 to vector<1x256xf32>
    %74 = arith.mulf %73, %72 : vector<1x256xf32>
    %75 = arith.addf %70, %74 : vector<1x256xf32>
    %c3_27 = arith.constant 3 : index
    %c2_28 = arith.constant 2 : index
    %76 = memref.load %arg4[%c3_27, %c2_28] : memref<4x4xf32, #tpu.memory_space<smem>>
    %77 = vector.extract_strided_slice %1 {offsets = [2, 0], sizes = [1, 256], strides = [1, 1]} : vector<4x256xf32> to vector<1x256xf32>
    %78 = vector.broadcast %76 : f32 to vector<1x256xf32>
    %79 = arith.mulf %78, %77 : vector<1x256xf32>
    %80 = arith.addf %75, %79 : vector<1x256xf32>
    %c3_29 = arith.constant 3 : index
    %c3_30 = arith.constant 3 : index
    %81 = memref.load %arg4[%c3_29, %c3_30] : memref<4x4xf32, #tpu.memory_space<smem>>
    %82 = vector.extract_strided_slice %1 {offsets = [3, 0], sizes = [1, 256], strides = [1, 1]} : vector<4x256xf32> to vector<1x256xf32>
    %83 = vector.broadcast %81 : f32 to vector<1x256xf32>
    %84 = arith.mulf %83, %82 : vector<1x256xf32>
    %85 = arith.addf %80, %84 : vector<1x256xf32>
    %86 = tpu.concatenate %22, %43, %64, %85 in 0 : vector<1x256xf32>, vector<1x256xf32>, vector<1x256xf32>, vector<1x256xf32> -> vector<4x256xf32>
    %c0_31 = arith.constant 0 : index
    %c0_32 = arith.constant 0 : index
    %c0_33 = arith.constant 0 : index
    %87 = vector.load %arg5[%c0_31, %c0_32, %c0_33] : memref<1x4x1xf32, #tpu.memory_space<vmem>>, vector<1x4x1xf32>
    %88 = vector.shape_cast %87 : vector<1x4x1xf32> to vector<4x1xf32>
    %89 = vector.broadcast %88 : vector<4x1xf32> to vector<4x256xf32>
    %90 = arith.addf %86, %89 : vector<4x256xf32>
    %c0_34 = arith.constant 0 : index
    %c0_35 = arith.constant 0 : index
    %c0_36 = arith.constant 0 : index
    %c0_37 = arith.constant 0 : index
    %91 = vector.load %arg6[%c0_34, %c0_35, %c0_36, %c0_37] : memref<1x1x4x256xf32, #tpu.memory_space<vmem>>, vector<1x1x4x256xf32>
    %92 = vector.shape_cast %91 : vector<1x1x4x256xf32> to vector<4x256xf32>
    %93 = vector.shape_cast %90 : vector<4x256xf32> to vector<1x1x4x256xf32>
    tpu.vector_store %arg6[%c0_34, %c0_35, %c0_36, %c0_37], %93 {strides = array<i32>} : memref<1x1x4x256xf32, #tpu.memory_space<vmem>>, vector<1x1x4x256xf32>,
    return
  }
  func.func @transform_0(%arg0: i32, %arg1: i32, %arg2: i32) -> (i32, i32, i32) {
    %c0_i32 = arith.constant 0 : i32
    %c0_i32_0 = arith.constant 0 : i32
    return %arg1, %c0_i32, %arg2 : i32, i32, i32
  }
  func.func @transform_1(%arg0: i32, %arg1: i32, %arg2: i32) -> (i32, i32) {
    %c0_i32 = arith.constant 0 : i32
    %c0_i32_0 = arith.constant 0 : i32
    %c0_i32_1 = arith.constant 0 : i32
    return %c0_i32, %c0_i32_0 : i32, i32
  }
  func.func @transform_2(%arg0: i32, %arg1: i32, %arg2: i32) -> (i32, i32, i32) {
    %c0_i32 = arith.constant 0 : i32
    %c0_i32_0 = arith.constant 0 : i32
    %c0_i32_1 = arith.constant 0 : i32
    return %arg0, %c0_i32, %c0_i32_0 : i32, i32, i32
  }
  func.func @transform_3(%arg0: i32, %arg1: i32, %arg2: i32) -> (i32, i32, i32, i32) {
    %c0_i32 = arith.constant 0 : i32
    %c0_i32_0 = arith.constant 0 : i32
    return %arg0, %arg1, %c0_i32, %arg2 : i32, i32, i32, i32
  }
}

</mosaic_0001>

<llo_original>
// kernel: tpu_custom_call.1
$region0: #{tpu_custom_call.1}
  #allocation0 [shape = 'u32[]', space=smem, size = 0x4, offset = 0x4, fixed_abs, tag = 'smem constant byte address 0x4 - core index']
  #allocation1 [shape = 'u32[144,128]{1,0:T(1,128)}', space=vmem, size = 0x12000, scoped, tag = 'internal scratch']
  %s0 = inlined_call_operand.hbm [shape: f32[2,4,256], index: 0, kind: input, shape index: {}]
  %s1 = inlined_call_operand.vmem [shape: f32[4,4], index: 1, kind: input, shape index: {}]
  %s2 = inlined_call_operand.vmem [shape: f32[2,4,1], index: 2, kind: input, shape index: {}]
  %s3 = inlined_call_operand.hbm [shape: f32[2,2,4,256], index: 3, kind: output, shape index: {}]
  %s4 = sld [smem:[#allocation0]]
  $region53: #{tpu_custom_call.1} parent=0
    _
  %s6 = ssub.s32 1, %s4
  %s7 = scalar_select 0, %s6, %s4
  $region1: #{tpu_custom_call.1} parent=0
    #allocation2 [shape = 'u8[8192]{0}', space=vmem, size = 0x2000, scoped, tag = 'input window, operand 0']
    #allocation3 [shape = 's32[2]{0}', space=sflag, size = 0x8, scoped, tag = 'scoped memory for tpu_custom_call.1']
    #allocation4 [shape = 's32[2]{0}', space=sflag, size = 0x8, scoped, tag = 'scoped memory for tpu_custom_call.1']
    #allocation5 [shape = 's32[2]{0}', space=sflag, size = 0x8, scoped, tag = 'scoped memory for tpu_custom_call.1']
    #allocation6 [shape = 'u8[2048]{0}', space=smem, size = 0x800, scoped, tag = 'input window, operand 1, single buffered']
    #allocation7 [shape = 'u8[8192]{0}', space=vmem, size = 0x2000, scoped, tag = 'output window, operand 0']
    %8 = vsyncpa [#allocation3], 0
    %s9 = scalar_lea.sflag [#allocation3], 1
    %10 = vsyncpa %s9, 0
    %11 = vsyncpa [#allocation5], 0
    %12 = vsyncpa [#allocation4], 0
    %s13 = scalar_lea.sflag [#allocation4], 1
    %14 = vsyncpa %s13, 0
    loop: start=0, step=1, limit=6
    $region2: #{tpu_custom_call.1} parent=1 // loop_pre_header
      _
    $region3: #{tpu_custom_call.1} parent=1 // loop_header
      %s16 = sphi 0, %s20
      %p17 = scmp.ge.s32.totalorder %s16, 6
      %s23 = sphi 0, %s42
      %s24 = sphi 0, %s38
      %s25 = sphi 0, %s34
      %s26 = sphi 0, %s23
      %s27 = sphi 0, %s24
      %s28 = sphi 0, %s25
      %s29 = sphi 0, %s26
      %s30 = sphi 0, %s27
      %s31 = sphi 0, %s28
      %s47 = sphi 0, %s49
      %s50 = sphi 0, %s47
      %s51 = sphi 0, %s50
      %s67 = sphi 0, %s51
      %s71 = sphi 0, %s71
      %s73 = sphi 0, %s71
      %s74 = sphi 0, %s73
      %s88 = sphi 0, %s74
      %s94 = sphi 0, %s96
      %s97 = sphi 0, %s94
      %s98 = sphi 0, %s97
      %s114 = sphi 0, %s98
      %s124 = sphi 0, %s126
      %s127 = sphi 0, %s124
      %s128 = sphi 0, %s127
      %s144 = sphi 0, %s128
    $region4: #{tpu_custom_call.1} parent=1 // loop_header_branch
      %19 = sbr.rel (%p17) target = $region8
    $region5: #{tpu_custom_call.1} parent=1 // loop_body
      %s21 = ssub.s32 %s16, 1
      %s22 = ssub.s32 %s16, 2
      %s32 = sadd.s32 1, %s25
      %p33 = scmp.ge.s32.totalorder %s32, 1
      %s34 = scalar_select %p33, 0, %s32
      %s35 = sadd.s32 1, %s24
      %s36 = scalar_select %p33, %s35, %s24
      %p37 = scmp.ge.s32.totalorder %s36, 2
      %s38 = scalar_select %p37, 0, %s36
      %s39 = sadd.s32 1, %s23
      %s40 = scalar_select %p37, %s39, %s23
      %p41 = scmp.ge.s32.totalorder %s40, 2
      %s42 = scalar_select %p41, 0, %s40
      %s43 = ssub.s32 %s24, %s38
      %s44 = ssub.s32 %s25, %s34
      %s45 = sor.u32 %s43, %s44
      %p46 = scmp.eq.s32.totalorder %s45, 0
      %s48 = sadd.s32 %s47, 1
      %s49 = scalar_select %p46, %s47, %s48
      %p52 = pneg %p46
      %p53 = scmp.eq.s32.totalorder %s16, 3
      %p54 = por %p52, %p53
      %p55 = scmp.ne.s32.totalorder %s47, %s50
      %p56 = scmp.eq.s32.totalorder %s16, 0
      %p57 = por %p55, %p56
      %p58 = scmp.ne.s32.totalorder %s47, %s50
      %p59 = scmp.eq.s32.totalorder %s21, 3
      %p60 = por %p58, %p59
      %p61 = scmp.ne.s32.totalorder %s50, %s51
      %p62 = scmp.eq.s32.totalorder %s21, 0
      %p63 = por %p61, %p62
      %p64 = scmp.ne.s32.totalorder %s50, %s51
      %p65 = scmp.eq.s32.totalorder %s22, 3
      %p66 = por %p64, %p65
      %p68 = scmp.ne.s32.totalorder %s51, %s67
      %p69 = scmp.eq.s32.totalorder %s22, 0
      %p70 = por %p68, %p69
      %s72 = sadd.s32 %s71, 1
      %p75 = scmp.eq.s32.totalorder %s16, 3
      %p76 = scmp.ne.s32.totalorder %s71, %s73
      %p77 = scmp.eq.s32.totalorder %s16, 0
      %p78 = por %p76, %p77
      %p79 = scmp.ne.s32.totalorder %s71, %s73
      %p80 = scmp.eq.s32.totalorder %s21, 3
      %p81 = por %p79, %p80
      %p82 = scmp.ne.s32.totalorder %s73, %s74
      %p83 = scmp.eq.s32.totalorder %s21, 0
      %p84 = por %p82, %p83
      %p85 = scmp.ne.s32.totalorder %s73, %s74
      %p86 = scmp.eq.s32.totalorder %s22, 3
      %p87 = por %p85, %p86
      %p89 = scmp.ne.s32.totalorder %s74, %s88
      %p90 = scmp.eq.s32.totalorder %s22, 0
      %p91 = por %p89, %p90
      %s92 = ssub.s32 %s23, %s42
      %p93 = scmp.eq.s32.totalorder %s92, 0
      %s95 = sadd.s32 %s94, 1
      %s96 = scalar_select %p93, %s94, %s95
      %p99 = pneg %p93
      %p100 = scmp.eq.s32.totalorder %s16, 3
      %p101 = por %p99, %p100
      %p102 = scmp.ne.s32.totalorder %s94, %s97
      %p103 = scmp.eq.s32.totalorder %s16, 0
      %p104 = por %p102, %p103
      %p105 = scmp.ne.s32.totalorder %s94, %s97
      %p106 = scmp.eq.s32.totalorder %s21, 3
      %p107 = por %p105, %p106
      %p108 = scmp.ne.s32.totalorder %s97, %s98
      %p109 = scmp.eq.s32.totalorder %s21, 0
      %p110 = por %p108, %p109
      %p111 = scmp.ne.s32.totalorder %s97, %s98
      %p112 = scmp.eq.s32.totalorder %s22, 3
      %p113 = por %p111, %p112
      %p115 = scmp.ne.s32.totalorder %s98, %s114
      %p116 = scmp.eq.s32.totalorder %s22, 0
      %p117 = por %p115, %p116
      %s118 = ssub.s32 %s23, %s42
      %s119 = ssub.s32 %s24, %s38
      %s120 = sor.u32 %s118, %s119
      %s121 = ssub.s32 %s25, %s34
      %s122 = sor.u32 %s120, %s121
      %p123 = scmp.eq.s32.totalorder %s122, 0
      %s125 = sadd.s32 %s124, 1
      %s126 = scalar_select %p123, %s124, %s125
      %p129 = pneg %p123
      %p130 = scmp.eq.s32.totalorder %s16, 3
      %p131 = por %p129, %p130
      %p132 = scmp.ne.s32.totalorder %s124, %s127
      %p133 = scmp.eq.s32.totalorder %s16, 0
      %p134 = por %p132, %p133
      %p135 = scmp.ne.s32.totalorder %s124, %s127
      %p136 = scmp.eq.s32.totalorder %s21, 3
      %p137 = por %p135, %p136
      %p138 = scmp.ne.s32.totalorder %s127, %s128
      %p139 = scmp.eq.s32.totalorder %s21, 0
      %p140 = por %p138, %p139
      %p141 = scmp.ne.s32.totalorder %s127, %s128
      %p142 = scmp.eq.s32.totalorder %s22, 3
      %p143 = por %p141, %p142
      %p145 = scmp.ne.s32.totalorder %s128, %s144
      %p146 = scmp.eq.s32.totalorder %s22, 0
      %p147 = por %p145, %p146
      %p148 = scmp.le.s32.totalorder 1, %s16
      %p149 = scmp.lt.s32.totalorder %s16, 5
      %p150 = pnand %p148, %p149
      %p151 = pneg %p150
      // Predicated region
      $region9: #{tpu_custom_call.1} parent=5 // pred_check
        _
      $region10: #{tpu_custom_call.1} parent=5 // pred_check_branch
        %153 = sbr.rel (%p150) target = $region12
      $region11: #{tpu_custom_call.1} parent=5 // pred_region
        %s154 = ssub.s32 %s16, 1
        // Predicated region
        $region13: #{tpu_custom_call.1} parent=11 // pred_check
          %p155 = pneg %p84
        $region14: #{tpu_custom_call.1} parent=11 // pred_check_branch
          %157 = sbr.rel (%p155) target = $region16
        $region15: #{tpu_custom_call.1} parent=11 // pred_region
          %s159 = ssub.s32 64, 64
          %160 = vsyncadd [#allocation5], %s159
          %s162 = sshll.u32 %s1, 4
          %s163 = int_to_ptr.vmem [resolvable:$true] %s162
          %165 = dma.vmem_to_smem %s163, 64, [#allocation6], [#allocation5]
        $region16: #{tpu_custom_call.1} parent=11 // pred_fallthru
          _
      $region12: #{tpu_custom_call.1} parent=5 // pred_fallthru
        _
      %p166 = scmp.lt.s32.totalorder %s16, 4
      // Predicated region
      $region17: #{tpu_custom_call.1} parent=5 // pred_check
        %p167 = pneg %p166
      $region18: #{tpu_custom_call.1} parent=5 // pred_check_branch
        %169 = sbr.rel (%p167) target = $region20
      $region19: #{tpu_custom_call.1} parent=5 // pred_region
        // Predicated region
        $region21: #{tpu_custom_call.1} parent=19 // pred_check
          %p170 = pneg %p57
        $region22: #{tpu_custom_call.1} parent=19 // pred_check_branch
          %172 = sbr.rel (%p170) target = $region24
        $region23: #{tpu_custom_call.1} parent=19 // pred_region
          %s173 = sand.u32 %s47, 1
          %s174 = scalar_lea.sflag [#allocation3], %s173
          %s175 = sand.u32 %s47, 1
          %s176 = smul.addr %s175, 8
          %s177 = scalar_lea.vmem [#allocation2], %s176
          %s178 = smul.u32 2, %s25
          %s180 = ssub.s32 128, 128
          %181 = vsyncadd %s174, %s180
          %s182 = smul.addr %s24, 2
          %s183 = sadd.s32 %s178, %s182
          %s184 = smul.addr %s183, 64
          %s185 = scalar_lea.hbm %s0, %s184
          %s187 = sshll.u32 %s177, 4
          %s188 = int_to_ptr.vmem [resolvable:$true] %s187
          %190 = dma.hbm_to_vmem [thread:$0]  %s185, 128, %s188, %s174
        $region24: #{tpu_custom_call.1} parent=19 // pred_fallthru
          _
        // Predicated region
        $region25: #{tpu_custom_call.1} parent=19 // pred_check
          %p191 = pneg %p104
        $region26: #{tpu_custom_call.1} parent=19 // pred_check_branch
          %193 = sbr.rel (%p191) target = $region28
        $region27: #{tpu_custom_call.1} parent=19 // pred_region
          %p194 = scmp.lt.s32.totalorder %s23, 1
          %s195 = scalar_select %p194, %s23, 1
          %s196 = smul.addr %s195, 4
          %s197 = scalar_lea.vmem %s2, %s196
        $region28: #{tpu_custom_call.1} parent=19 // pred_fallthru
          _
      $region20: #{tpu_custom_call.1} parent=5 // pred_fallthru
        _
      %p198 = scmp.le.s32.totalorder 1, %s16
      %p199 = scmp.lt.s32.totalorder %s16, 5
      %p200 = pnand %p198, %p199
      %p201 = pneg %p200
      // Predicated region
      $region29: #{tpu_custom_call.1} parent=5 // pred_check
        _
      $region30: #{tpu_custom_call.1} parent=5 // pred_check_branch
        %203 = sbr.rel (%p200) target = $region32
      $region31: #{tpu_custom_call.1} parent=5 // pred_region
        %s204 = ssub.s32 %s16, 1
        %s205 = sand.u32 %s50, 1
        %s206 = scalar_lea.sflag [#allocation3], %s205
        %s207 = sand.u32 %s50, 1
        %s208 = smul.addr %s207, 8
        %s209 = scalar_lea.vmem [#allocation2], %s208
        // Predicated region
        $region33: #{tpu_custom_call.1} parent=31 // pred_check
          %p210 = pneg %p63
        $region34: #{tpu_custom_call.1} parent=31 // pred_check_branch
          %212 = sbr.rel (%p210) target = $region36
        $region35: #{tpu_custom_call.1} parent=31 // pred_region
          %213 = dma.done %s206, 128
        $region36: #{tpu_custom_call.1} parent=31 // pred_fallthru
          _
        // Predicated region
        $region37: #{tpu_custom_call.1} parent=31 // pred_check
          %p214 = pneg %p84
        $region38: #{tpu_custom_call.1} parent=31 // pred_check_branch
          %216 = sbr.rel (%p214) target = $region40
        $region39: #{tpu_custom_call.1} parent=31 // pred_region
          %217 = dma.done [#allocation5], 64
        $region40: #{tpu_custom_call.1} parent=31 // pred_fallthru
          _
        %218 = sfence
        %s219 = sand.u32 %s50, 1
        %s220 = scalar_lea.sflag [#allocation3], %s219
        %s221 = sand.u32 %s50, 1
        %s222 = smul.addr %s221, 8
        %s223 = scalar_lea.vmem [#allocation2], %s222
        %p224 = pneg %p63
        %p225 = pneg %p60
        %p226 = pneg %p84
        %p227 = pneg %p81
        %p228 = scmp.lt.s32.totalorder %s26, 1
        %s229 = scalar_select %p228, %s26, 1
        %s230 = smul.addr %s229, 4
        %s231 = scalar_lea.vmem %s2, %s230
        %p232 = pneg %p110
        %p233 = pneg %p107
        %p234 = pneg %p140
        %p235 = pneg %p137
        %s236 = sand.u32 %s127, 1
        %s237 = scalar_lea.sflag [#allocation4], %s236
        %s238 = sand.u32 %s127, 1
        %s239 = smul.addr %s238, 8
        %s240 = scalar_lea.vmem [#allocation7], %s239
        %s241 = smul.u32 2, %s28
        %p242 = scmp.lt.s32.totalorder %s26, 1
        %s243 = scalar_select %p242, %s26, 1
        %s244 = smul.addr %s243, 4
        %s245 = scalar_lea.vmem %s2, %s244
        %s246 = smul.u32 2, %s28
        %v247 = vld [vmem:[%s209] sm:$0xff]
        %s248 = sld [smem:[#allocation6]]
        %v249 = vstv %s248
        %v250 = vmul.f32 %v249, %v247
        %v251 = vadd.f32 %v247, %v250
        %s252 = sld [smem:[#allocation6 + $0x1]]
        %v253 = vstv %s252
        %v254 = vmul.f32 %v253, %v247
        %v256 = vrot.slane %v254, 5
        %v257 = vrot.slane %v256, 4
        %v259 = vadd.f32 %v251, %v257
        %s260 = sld [smem:[#allocation6 + $0x2]]
        %v261 = vstv %s260
        %v262 = vmul.f32 %v261, %v247
        %v264 = vrot.slane %v262, 6
        %v265 = vrot.slane %v264, 4
        %v267 = vadd.f32 %v259, %v265
        %s268 = sld [smem:[#allocation6 + $0x3]]
        %v269 = vstv %s268
        %v270 = vmul.f32 %v269, %v247
        %v272 = vrot.slane %v270, 7
        %v273 = vrot.slane %v272, 4
        %v275 = vadd.f32 %v267, %v273
        %s276 = sld [smem:[#allocation6 + $0x80]]
        %v277 = vstv %s276
        %v278 = vmul.f32 %v277, %v247
        %v280 = vrot.slane %v278, 7
        %v282 = vadd.f32 %v247, %v280
        %s283 = sld [smem:[#allocation6 + $0x81]]
        %v284 = vstv %s283
        %v285 = vmul.f32 %v284, %v247
        %v286 = vadd.f32 %v282, %v285
        %s287 = sld [smem:[#allocation6 + $0x82]]
        %v288 = vstv %s287
        %v289 = vmul.f32 %v288, %v247
        %v291 = vrot.slane %v289, 5
        %v292 = vrot.slane %v291, 4
        %v294 = vadd.f32 %v286, %v292
        %s295 = sld [smem:[#allocation6 + $0x83]]
        %v296 = vstv %s295
        %v297 = vmul.f32 %v296, %v247
        %v299 = vrot.slane %v297, 6
        %v300 = vrot.slane %v299, 4
        %v302 = vadd.f32 %v294, %v300
        %s303 = sld [smem:[#allocation6 + $0x100]]
        %v304 = vstv %s303
        %v305 = vmul.f32 %v304, %v247
        %v307 = vrot.slane %v305, 6
        %v309 = vadd.f32 %v247, %v307
        %s310 = sld [smem:[#allocation6 + $0x101]]
        %v311 = vstv %s310
        %v312 = vmul.f32 %v311, %v247
        %v314 = vrot.slane %v312, 7
        %v316 = vadd.f32 %v309, %v314
        %s317 = sld [smem:[#allocation6 + $0x102]]
        %v318 = vstv %s317
        %v319 = vmul.f32 %v318, %v247
        %v320 = vadd.f32 %v316, %v319
        %s321 = sld [smem:[#allocation6 + $0x103]]
        %v322 = vstv %s321
        %v323 = vmul.f32 %v322, %v247
        %v325 = vrot.slane %v323, 5
        %v326 = vrot.slane %v325, 4
        %v328 = vadd.f32 %v320, %v326
        %s329 = sld [smem:[#allocation6 + $0x180]]
        %v330 = vstv %s329
        %v331 = vmul.f32 %v330, %v247
        %v333 = vrot.slane %v331, 5
        %v335 = vadd.f32 %v247, %v333
        %s336 = sld [smem:[#allocation6 + $0x181]]
        %v337 = vstv %s336
        %v338 = vmul.f32 %v337, %v247
        %v340 = vrot.slane %v338, 6
        %v342 = vadd.f32 %v335, %v340
        %s343 = sld [smem:[#allocation6 + $0x182]]
        %v344 = vstv %s343
        %v345 = vmul.f32 %v344, %v247
        %v347 = vrot.slane %v345, 7
        %v349 = vadd.f32 %v342, %v347
        %s350 = sld [smem:[#allocation6 + $0x183]]
        %v351 = vstv %s350
        %v352 = vmul.f32 %v351, %v247
        %v353 = vadd.f32 %v349, %v352
        %v355 = vlaneseq
        %v356 = vshrl.u32 %v355, 7
        %v357 = vsub.s32 0, %v356
        %v358 = vrot.slane %v275, %v357
        %v359 = vlaneseq
        %v360 = vshrl.u32 %v359, 7
        %v361 = vsub.s32 4, %v360
        %v362 = vrot.slane %v275, %v361
        %v366 = vlaneseq
        %v367 = vshrl.u32 %v366, 7
        %v368 = vsub.s32 1, %v367
        %v369 = vrot.slane %v302, %v368
        %v370 = vlaneseq
        %v371 = vshrl.u32 %v370, 7
        %v372 = vsub.s32 5, %v371
        %v373 = vrot.slane %v302, %v372
        %v377 = vlaneseq
        %v378 = vshrl.u32 %v377, 7
        %v379 = vsub.s32 2, %v378
        %v380 = vrot.slane %v328, %v379
        %v381 = vlaneseq
        %v382 = vshrl.u32 %v381, 7
        %v383 = vsub.s32 6, %v382
        %v384 = vrot.slane %v328, %v383
        %v388 = vlaneseq
        %v389 = vshrl.u32 %v388, 7
        %v390 = vsub.s32 3, %v389
        %v391 = vrot.slane %v353, %v390
        %v392 = vlaneseq
        %v393 = vshrl.u32 %v392, 7
        %v394 = vsub.s32 7, %v393
        %v395 = vrot.slane %v353, %v394
        %vm398 = vcmask 1040384
        %v399 = vsel %vm398, %v358, %v369
        %v400 = vsel %vm398, %v362, %v373
        %vm401 = vcmask 1041408
        %v402 = vsel %vm401, %v399, %v380
        %v403 = vsel %vm401, %v400, %v384
        %vm404 = vcmask 1042432
        %v405 = vsel %vm404, %v402, %v391
        %v406 = vsel %vm404, %v403, %v395
        %v407 = vld [vmem:[%s245] sm:$0xf]
        %409 = vset.pattern.permute.xlu0 0
        %410 = vperm.xlu0 %409, %v407
        %v411 = vpop.permute.xlu0 %410
        %v413 = vadd.f32 %v405, %v411
        %v414 = vadd.f32 %v406, %v411
        %v417 = vcombine.low %v413, %v414
        %419 = vst [vmem:[%s240] sm:$0xff] %v417
        %s420 = sand.u32 %s127, 1
        %s421 = scalar_lea.sflag [#allocation4], %s420
        %s422 = sand.u32 %s127, 1
        %s423 = smul.addr %s422, 8
        %s424 = scalar_lea.vmem [#allocation7], %s423
        // Predicated region
        $region41: #{tpu_custom_call.1} parent=31 // pred_check
          %p425 = pneg %p137
        $region42: #{tpu_custom_call.1} parent=31 // pred_check_branch
          %427 = sbr.rel (%p425) target = $region44
        $region43: #{tpu_custom_call.1} parent=31 // pred_region
          %s428 = smul.u32 2, %s28
          %s430 = ssub.s32 128, 128
          %431 = vsyncadd %s421, %s430
          %s432 = smul.addr %s27, 2
          %s433 = sadd.s32 %s428, %s432
          %s434 = smul.addr %s26, 4
          %s435 = sadd.s32 %s433, %s434
          %s436 = smul.addr %s435, 64
          %s437 = scalar_lea.hbm %s3, %s436
          %s439 = sshll.u32 %s424, 4
          %s440 = int_to_ptr.vmem [resolvable:$true] %s439
          %442 = dma.vmem_to_hbm [thread:$0]  %s440, 128, %s437, %s421
        $region44: #{tpu_custom_call.1} parent=31 // pred_fallthru
          _
      $region32: #{tpu_custom_call.1} parent=5 // pred_fallthru
        _
      %p443 = scmp.le.s32.totalorder 2, %s16
      // Predicated region
      $region45: #{tpu_custom_call.1} parent=5 // pred_check
        %p444 = pneg %p443
      $region46: #{tpu_custom_call.1} parent=5 // pred_check_branch
        %446 = sbr.rel (%p444) target = $region48
      $region47: #{tpu_custom_call.1} parent=5 // pred_region
        %s447 = ssub.s32 %s16, 2
        // Predicated region
        $region49: #{tpu_custom_call.1} parent=47 // pred_check
          %p448 = pneg %p143
        $region50: #{tpu_custom_call.1} parent=47 // pred_check_branch
          %450 = sbr.rel (%p448) target = $region52
        $region51: #{tpu_custom_call.1} parent=47 // pred_region
          %s451 = sand.u32 %s128, 1
          %s452 = scalar_lea.sflag [#allocation4], %s451
          %s453 = sand.u32 %s128, 1
          %s454 = smul.addr %s453, 8
          %s455 = scalar_lea.vmem [#allocation7], %s454
          %456 = dma.done %s452, 128
        $region52: #{tpu_custom_call.1} parent=47 // pred_fallthru
          _
      $region48: #{tpu_custom_call.1} parent=5 // pred_fallthru
        _
    $region6: #{tpu_custom_call.1} parent=1 // loop_footer
      %s20 = sadd.s32 1, %s16
    $region7: #{tpu_custom_call.1} parent=1 // loop_footer_branch
      %15 = sbr.rel target = $region3
    $region8: #{tpu_custom_call.1} parent=1 // loop_exit
      _
    %457 = vsyncpa [#allocation3], 1
    %s458 = scalar_lea.sflag [#allocation3], 1
    %459 = vsyncpa %s458, 1
    %460 = vsyncpa [#allocation4], 1
    %s461 = scalar_lea.sflag [#allocation4], 1
    %462 = vsyncpa %s461, 1
    %463 = vsyncpa [#allocation5], 1
    %s464 = scalar_lea.sflag [#allocation5], 1
    %465 = vsyncpa %s464, 1

</llo_original>
